<compile_context>
chip_gen: v7x
topology: tpu7x:2x2x1
jax: 0.10.0
libtpu: 0.0.40
codegen_flags: <defaults>
</compile_context>

<pallas_src>
import numpy as np
import jax
import jax.numpy as jnp
from jax.experimental import pallas as pl
from jax.experimental.pallas import tpu as pltpu

WINDOW_SIZE = 11
SIGMA = 1.5
C1 = 0.01 ** 2
C2 = 0.03 ** 2
_LANE = 128
_LANE_TARGET = 512           # aim for >=512-lane blocks (tiling sweet spot)


def gaussian_1d(window_size=WINDOW_SIZE, sigma=SIGMA):
    # deterministic "parameter" init, matching create_window()/gaussian()
    xs = np.arange(window_size, dtype=np.float64)
    g = np.exp(-((xs - window_size // 2) ** 2) / (2.0 * sigma ** 2))
    return (g / g.sum()).astype(np.float32)


def _round_up(x, m):
    return ((x + m - 1) // m) * m


def _build_toeplitz(H, W, PPB, WL, window_size):
    """Banded-Toeplitz matrices implementing the separable 'same' conv."""
    g = gaussian_1d(window_size)
    pad = window_size // 2
    Hp = H + 2 * pad
    # vertical pass: out[h, :] = sum_k g[k] * x_pad[h + k, :]  ->  V @ X_pad
    V = np.zeros((H, Hp), np.float32)
    for h in range(H):
        V[h, h:h + window_size] = g
    # horizontal pass: per-plane banded block, block-diagonal over packed planes
    band = np.zeros((W, W), np.float32)
    for w in range(W):
        for k in range(window_size):
            c = w - pad + k
            if 0 <= c < W:
                band[c, w] = g[k]
    T = np.zeros((WL, WL), np.float32)
    for p in range(PPB):
        T[p * W:(p + 1) * W, p * W:(p + 1) * W] = band
    return jnp.asarray(V), jnp.asarray(T)


def _make_kernel(H, W, WL, PPB, NC, need_mask):
    """Kernel for one packed block: (Hp, WL) planes -> (1, WL) column sums."""

    def kernel(v_ref, t_ref, p1_ref, p2_ref, out_ref):
        x1 = p1_ref[0]                 # (Hp, WL) f32, vertically zero-padded
        x2 = p2_ref[0]
        V = v_ref[...]                 # (H, Hp)  vertical tap matrix
        T = t_ref[...]                 # (WL, WL) block-diag horizontal taps

        # One fused vertical pass over all five slabs on the MXU.
        S = jnp.concatenate([x1, x2, x1 * x1, x2 * x2, x1 * x2], axis=1)
        Y = jnp.dot(V, S, preferred_element_type=jnp.float32)   # (H, 5*WL)

        # Five horizontal banded-Toeplitz matmuls sharing the resident T.
        def hconv(i):
            return jnp.dot(Y[:, i * WL:(i + 1) * WL], T,
                           preferred_element_type=jnp.float32)

        mu1, mu2 = hconv(0), hconv(1)
        e11, e22, e12 = hconv(2), hconv(3), hconv(4)

        mu1_sq = mu1 * mu1
        mu2_sq = mu2 * mu2
        mu1_mu2 = mu1 * mu2
        sigma1_sq = e11 - mu1_sq
        sigma2_sq = e22 - mu2_sq
        sigma12 = e12 - mu1_mu2

        num = (2.0 * mu1_mu2 + C1) * (2.0 * sigma12 + C2)
        den = (mu1_sq + mu2_sq + C1) * (sigma1_sq + sigma2_sq + C2)
        ssim_map = num / den                                     # (H, WL)

        if need_mask:
            # zero lane-tail / phantom-plane columns (their SSIM is 1, not 0);
            # computed in-kernel, no mask DMA.
            b = pl.program_id(0)
            n_valid = jnp.minimum(PPB, NC - b * PPB) * W
            col = jax.lax.broadcasted_iota(jnp.int32, (H, WL), 1)
            ssim_map = jnp.where(col < n_valid, ssim_map, 0.0)

        # per-column partial sums; lane-dense (WL multiple of 128) output row.
        out_ref[...] = jnp.sum(ssim_map, axis=0, keepdims=True)[None]

    return kernel


def ssim_pallas(img1, img2, window_size=WINDOW_SIZE, size_average=True):
    N, C, H, W = img1.shape
    NC = N * C
    pad = window_size // 2
    Hp = H + 2 * pad

    # Pack channel-planes side-by-side along lanes (no inter-plane halo: the
    # block-diagonal Toeplitz matrix already respects plane boundaries).
    if W >= _LANE_TARGET:
        PPB = 1
    else:
        PPB = min(NC, max(1, _LANE_TARGET // W))
    NB = -(-NC // PPB)                       # number of packed blocks (grid)
    WL = _round_up(PPB * W, _LANE)           # lane-dense block width
    need_mask = (WL != PPB * W) or (NB * PPB != NC)

    V, T = _build_toeplitz(H, W, PPB, WL, window_size)

    def pack(img):
        # (N,C,H,W) -> (NB, Hp, WL): planes laid contiguously along lanes,
        # vertical conv halo of zeros, lane tail zero.
        x = img.reshape(NC, H, W).astype(jnp.float32)
        x = jnp.pad(x, ((0, NB * PPB - NC), (0, 0), (0, 0)))
        x = x.reshape(NB, PPB, H, W).transpose(0, 2, 1, 3).reshape(NB, H, PPB * W)
        x = jnp.pad(x, ((0, 0), (pad, pad), (0, WL - PPB * W)))
        return x

    p1 = pack(img1)
    p2 = pack(img2)

    kernel = _make_kernel(H, W, WL, PPB, NC, need_mask)

    out = pl.pallas_call(
        kernel,
        out_shape=jax.ShapeDtypeStruct((NB, 1, WL), jnp.float32),
        grid=(NB,),
        in_specs=[
            pl.BlockSpec((H, Hp), lambda b: (0, 0)),        # V (kept resident)
            pl.BlockSpec((WL, WL), lambda b: (0, 0)),       # T (kept resident)
            pl.BlockSpec((1, Hp, WL), lambda b: (b, 0, 0)),  # packed img1
            pl.BlockSpec((1, Hp, WL), lambda b: (b, 0, 0)),  # packed img2
        ],
        out_specs=pl.BlockSpec((1, 1, WL), lambda b: (b, 0, 0)),
        compiler_params=pltpu.CompilerParams(
            dimension_semantics=("parallel",)),
    )(V, T, p1, p2)

    total = jnp.sum(out)
    if size_average:
        return total / (N * C * H * W)
    # TODO(synk): size_average=False (per-image mean) not wired up; module default is True.
    raise NotImplementedError("size_average=False not implemented")


def ssim_ref(img1, img2, window_size=WINDOW_SIZE):
    """Pure-JAX reference mirroring the PyTorch _ssim (for a numeric check)."""
    N, C, H, W = img1.shape
    g = gaussian_1d(window_size)
    w2d = np.outer(g, g).astype(np.float32)
    window = jnp.asarray(np.tile(w2d[None, None], (C, 1, 1, 1)))
    pad = window_size // 2

    def conv(x):
        return jax.lax.conv_general_dilated(
            x.astype(jnp.float32), window, window_strides=(1, 1),
            padding=[(pad, pad), (pad, pad)],
            dimension_numbers=("NCHW", "OIHW", "NCHW"),
            feature_group_count=C,
            precision=jax.lax.Precision.HIGHEST)

    mu1, mu2 = conv(img1), conv(img2)
    mu1_sq, mu2_sq, mu1_mu2 = mu1 * mu1, mu2 * mu2, mu1 * mu2
    sigma1_sq = conv(img1 * img1) - mu1_sq
    sigma2_sq = conv(img2 * img2) - mu2_sq
    sigma12 = conv(img1 * img2) - mu1_mu2
    ssim_map = ((2 * mu1_mu2 + C1) * (2 * sigma12 + C2) /
                ((mu1_sq + mu2_sq + C1) * (sigma1_sq + sigma2_sq + C2)))
    return ssim_map.mean()


if __name__ == "__main__":
    key = jax.random.PRNGKey(0)
    k1, k2 = jax.random.split(key)
    shape = (2, 4, 16, 16)                      # N, C, H, W
    img1 = jax.random.uniform(k1, shape, dtype=jnp.float32)
    noise = jax.random.uniform(k2, shape, dtype=jnp.float32)
    # correlated pair -> large, numerically stable SSIM value for the check
    img2 = jnp.clip(0.85 * img1 + 0.15 * noise, 0.0, 1.0)

    ssim_fn = jax.jit(ssim_pallas)
    result = jax.block_until_ready(ssim_fn(img1, img2))
    expected = jax.block_until_ready(ssim_ref(img1, img2))

    np.testing.assert_allclose(np.asarray(result), np.asarray(expected),
                               rtol=1e-3, atol=2e-4)
    print("KERNEL_OK")
</pallas_src>

<mosaic_0001>
module attributes {stable_mosaic.version = 11 : i64} {
  func.func @kernel(%arg0: i32, %arg1: memref<16x26xf32, #tpu.memory_space<vmem>>, %arg2: memref<128x128xf32, #tpu.memory_space<vmem>>, %arg3: memref<1x26x128xf32, #tpu.memory_space<vmem>>, %arg4: memref<1x26x128xf32, #tpu.memory_space<vmem>>, %arg5: memref<1x1x128xf32, #tpu.memory_space<vmem>>) attributes {dimension_semantics = [#tpu.dimension_semantics<parallel>], iteration_bounds = array<i64: 1>, scalar_prefetch = 0 : i64, scratch_operands = 0 : i64, tpu.core_type = #tpu.core_type<tc>, window_params = [{pipeline_mode = #tpu.pipeline_mode<synchronous>, transform_indices = @transform_0, window_bounds = array<i64: 16, 26>}, {pipeline_mode = #tpu.pipeline_mode<synchronous>, transform_indices = @transform_1, window_bounds = array<i64: 128, 128>}, {transform_indices = @transform_2, window_bounds = array<i64: 1, 26, 128>}, {transform_indices = @transform_3, window_bounds = array<i64: 1, 26, 128>}, {transform_indices = @transform_4, window_bounds = array<i64: 1, 1, 128>}]} {
    %c0 = arith.constant 0 : index
    %c0_0 = arith.constant 0 : index
    %c0_1 = arith.constant 0 : index
    %0 = vector.load %arg3[%c0, %c0_0, %c0_1] : memref<1x26x128xf32, #tpu.memory_space<vmem>>, vector<1x26x128xf32>
    %1 = vector.shape_cast %0 : vector<1x26x128xf32> to vector<26x128xf32>
    %c0_2 = arith.constant 0 : index
    %c0_3 = arith.constant 0 : index
    %c0_4 = arith.constant 0 : index
    %2 = vector.load %arg4[%c0_2, %c0_3, %c0_4] : memref<1x26x128xf32, #tpu.memory_space<vmem>>, vector<1x26x128xf32>
    %3 = vector.shape_cast %2 : vector<1x26x128xf32> to vector<26x128xf32>
    %c0_5 = arith.constant 0 : index
    %c0_6 = arith.constant 0 : index
    %4 = vector.load %arg1[%c0_5, %c0_6] : memref<16x26xf32, #tpu.memory_space<vmem>>, vector<16x26xf32>
    %c0_7 = arith.constant 0 : index
    %c0_8 = arith.constant 0 : index
    %5 = vector.load %arg2[%c0_7, %c0_8] : memref<128x128xf32, #tpu.memory_space<vmem>>, vector<128x128xf32>
    %6 = arith.mulf %1, %1 : vector<26x128xf32>
    %7 = arith.mulf %3, %3 : vector<26x128xf32>
    %8 = arith.mulf %1, %3 : vector<26x128xf32>
    %9 = tpu.concatenate %1, %3, %6, %7, %8 in 1 : vector<26x128xf32>, vector<26x128xf32>, vector<26x128xf32>, vector<26x128xf32>, vector<26x128xf32> -> vector<26x640xf32>
    %cst = arith.constant dense<0.000000e+00> : vector<16x640xf32>
    %10 = tpu.matmul %4, %9, %cst {dimension_numbers = #tpu.dot_dimension_numbers<[1], [0], [0], [1], [0, 0, 1, 1], [], []>} : vector<16x26xf32>, vector<26x640xf32>, vector<16x640xf32> -> vector<16x640xf32>
    %11 = vector.extract_strided_slice %10 {offsets = [0, 0], sizes = [16, 128], strides = [1, 1]} : vector<16x640xf32> to vector<16x128xf32>
    %cst_9 = arith.constant dense<0.000000e+00> : vector<16x128xf32>
    %12 = tpu.matmul %11, %5, %cst_9 {dimension_numbers = #tpu.dot_dimension_numbers<[1], [0], [0], [1], [0, 0, 1, 1], [], []>} : vector<16x128xf32>, vector<128x128xf32>, vector<16x128xf32> -> vector<16x128xf32>
    %13 = vector.extract_strided_slice %10 {offsets = [0, 128], sizes = [16, 128], strides = [1, 1]} : vector<16x640xf32> to vector<16x128xf32>
    %cst_10 = arith.constant dense<0.000000e+00> : vector<16x128xf32>
    %14 = tpu.matmul %13, %5, %cst_10 {dimension_numbers = #tpu.dot_dimension_numbers<[1], [0], [0], [1], [0, 0, 1, 1], [], []>} : vector<16x128xf32>, vector<128x128xf32>, vector<16x128xf32> -> vector<16x128xf32>
    %15 = vector.extract_strided_slice %10 {offsets = [0, 256], sizes = [16, 128], strides = [1, 1]} : vector<16x640xf32> to vector<16x128xf32>
    %cst_11 = arith.constant dense<0.000000e+00> : vector<16x128xf32>
    %16 = tpu.matmul %15, %5, %cst_11 {dimension_numbers = #tpu.dot_dimension_numbers<[1], [0], [0], [1], [0, 0, 1, 1], [], []>} : vector<16x128xf32>, vector<128x128xf32>, vector<16x128xf32> -> vector<16x128xf32>
    %17 = vector.extract_strided_slice %10 {offsets = [0, 384], sizes = [16, 128], strides = [1, 1]} : vector<16x640xf32> to vector<16x128xf32>
    %cst_12 = arith.constant dense<0.000000e+00> : vector<16x128xf32>
    %18 = tpu.matmul %17, %5, %cst_12 {dimension_numbers = #tpu.dot_dimension_numbers<[1], [0], [0], [1], [0, 0, 1, 1], [], []>} : vector<16x128xf32>, vector<128x128xf32>, vector<16x128xf32> -> vector<16x128xf32>
    %19 = vector.extract_strided_slice %10 {offsets = [0, 512], sizes = [16, 128], strides = [1, 1]} : vector<16x640xf32> to vector<16x128xf32>
    %cst_13 = arith.constant dense<0.000000e+00> : vector<16x128xf32>
    %20 = tpu.matmul %19, %5, %cst_13 {dimension_numbers = #tpu.dot_dimension_numbers<[1], [0], [0], [1], [0, 0, 1, 1], [], []>} : vector<16x128xf32>, vector<128x128xf32>, vector<16x128xf32> -> vector<16x128xf32>
    %21 = arith.mulf %12, %12 : vector<16x128xf32>
    %22 = arith.mulf %14, %14 : vector<16x128xf32>
    %23 = arith.mulf %12, %14 : vector<16x128xf32>
    %24 = arith.subf %16, %21 : vector<16x128xf32>
    %25 = arith.subf %18, %22 : vector<16x128xf32>
    %26 = arith.subf %20, %23 : vector<16x128xf32>
    %cst_14 = arith.constant 2.000000e+00 : f32
    %27 = vector.broadcast %cst_14 : f32 to vector<16x128xf32>
    %28 = arith.mulf %27, %23 : vector<16x128xf32>
    %cst_15 = arith.constant 9.99999974E-5 : f32
    %29 = vector.broadcast %cst_15 : f32 to vector<16x128xf32>
    %30 = arith.addf %28, %29 : vector<16x128xf32>
    %cst_16 = arith.constant 2.000000e+00 : f32
    %31 = vector.broadcast %cst_16 : f32 to vector<16x128xf32>
    %32 = arith.mulf %31, %26 : vector<16x128xf32>
    %cst_17 = arith.constant 8.99999984E-4 : f32
    %33 = vector.broadcast %cst_17 : f32 to vector<16x128xf32>
    %34 = arith.addf %32, %33 : vector<16x128xf32>
    %35 = arith.mulf %30, %34 : vector<16x128xf32>
    %36 = arith.addf %21, %22 : vector<16x128xf32>
    %cst_18 = arith.constant 9.99999974E-5 : f32
    %37 = vector.broadcast %cst_18 : f32 to vector<16x128xf32>
    %38 = arith.addf %36, %37 : vector<16x128xf32>
    %39 = arith.addf %24, %25 : vector<16x128xf32>
    %cst_19 = arith.constant 8.99999984E-4 : f32
    %40 = vector.broadcast %cst_19 : f32 to vector<16x128xf32>
    %41 = arith.addf %39, %40 : vector<16x128xf32>
    %42 = arith.mulf %38, %41 : vector<16x128xf32>
    %43 = arith.divf %35, %42 : vector<16x128xf32>
    %cst_20 = arith.constant dense<0.000000e+00> : vector<128xf32>
    %44 = vector.multi_reduction <add>, %43, %cst_20 [0] : vector<16x128xf32> to vector<128xf32>
    %45 = vector.shape_cast %44 : vector<128xf32> to vector<1x128xf32>
    %46 = vector.shape_cast %45 : vector<1x128xf32> to vector<1x1x128xf32>
    %c0_21 = arith.constant 0 : index
    %c0_22 = arith.constant 0 : index
    %c0_23 = arith.constant 0 : index
    %47 = vector.load %arg5[%c0_21, %c0_22, %c0_23] : memref<1x1x128xf32, #tpu.memory_space<vmem>>, vector<1x1x128xf32>
    tpu.vector_store %arg5[%c0_21, %c0_22, %c0_23], %46 {strides = array<i32>} : memref<1x1x128xf32, #tpu.memory_space<vmem>>, vector<1x1x128xf32>,
    return
  }
  func.func @transform_0(%arg0: i32) -> (i32, i32) {
    %c0_i32 = arith.constant 0 : i32
    %c0_i32_0 = arith.constant 0 : i32
    %c0_i32_1 = arith.constant 0 : i32
    return %c0_i32, %c0_i32_0 : i32, i32
  }
  func.func @transform_1(%arg0: i32) -> (i32, i32) {
    %c0_i32 = arith.constant 0 : i32
    %c0_i32_0 = arith.constant 0 : i32
    %c0_i32_1 = arith.constant 0 : i32
    return %c0_i32, %c0_i32_0 : i32, i32
  }
  func.func @transform_2(%arg0: i32) -> (i32, i32, i32) {
    %c0_i32 = arith.constant 0 : i32
    %c0_i32_0 = arith.constant 0 : i32
    %c0_i32_1 = arith.constant 0 : i32
    return %arg0, %c0_i32, %c0_i32_0 : i32, i32, i32
  }
  func.func @transform_3(%arg0: i32) -> (i32, i32, i32) {
    %c0_i32 = arith.constant 0 : i32
    %c0_i32_0 = arith.constant 0 : i32
    %c0_i32_1 = arith.constant 0 : i32
    return %arg0, %c0_i32, %c0_i32_0 : i32, i32, i32
  }
  func.func @transform_4(%arg0: i32) -> (i32, i32, i32) {
    %c0_i32 = arith.constant 0 : i32
    %c0_i32_0 = arith.constant 0 : i32
    %c0_i32_1 = arith.constant 0 : i32
    return %arg0, %c0_i32, %c0_i32_0 : i32, i32, i32
  }
}

</mosaic_0001>

<llo_original>
// kernel: ssim_pallas.1
$region0: #{ssim_pallas.1}
  #allocation0 [shape = 'u32[]', space=smem, size = 0x4, offset = 0x4, fixed_abs, tag = 'smem constant byte address 0x4 - core index']
  #allocation1 [shape = 'u32[144,128]{1,0:T(1,128)}', space=vmem, size = 0x12000, scoped, tag = 'internal scratch']
  %s0 = inlined_call_operand.vmem [shape: f32[16,26], index: 0, kind: input, shape index: {}]
  %s1 = inlined_call_operand.vmem [shape: f32[128,128], index: 1, kind: input, shape index: {}]
  %s2 = inlined_call_operand.vmem [shape: f32[1,26,128], index: 2, kind: input, shape index: {}]
  %s3 = inlined_call_operand.vmem [shape: f32[1,26,128], index: 3, kind: input, shape index: {}]
  %s4 = inlined_call_operand.vmem [shape: f32[1,1,128], index: 4, kind: output, shape index: {}]
  %s5 = sld [smem:[#allocation0]]
  $region26: #{ssim_pallas.1} parent=0
    _
  %s7 = ssub.s32 1, %s5
  %s8 = scalar_select 0, %s7, %s5
  // Predicated region
  $region2: #{ssim_pallas.1} parent=0 // pred_check
    _
  $region3: #{ssim_pallas.1} parent=0 // pred_check_branch
    %10 = sbr.rel (0) target = $region5
  $region4: #{ssim_pallas.1} parent=0 // pred_region
    _
  $region5: #{ssim_pallas.1} parent=0 // pred_fallthru
    _
  // Predicated region
  $region6: #{ssim_pallas.1} parent=0 // pred_check
    _
  $region7: #{ssim_pallas.1} parent=0 // pred_check_branch
    %12 = sbr.rel (0) target = $region9
  $region8: #{ssim_pallas.1} parent=0 // pred_region
    _
  $region9: #{ssim_pallas.1} parent=0 // pred_fallthru
    _
  // Predicated region
  $region10: #{ssim_pallas.1} parent=0 // pred_check
    _
  $region11: #{ssim_pallas.1} parent=0 // pred_check_branch
    %14 = sbr.rel (0) target = $region13
  $region12: #{ssim_pallas.1} parent=0 // pred_region
    _
  $region13: #{ssim_pallas.1} parent=0 // pred_fallthru
    _
  // Predicated region
  $region14: #{ssim_pallas.1} parent=0 // pred_check
    _
  $region15: #{ssim_pallas.1} parent=0 // pred_check_branch
    %16 = sbr.rel (0) target = $region17
  $region16: #{ssim_pallas.1} parent=0 // pred_region
    _
  $region17: #{ssim_pallas.1} parent=0 // pred_fallthru
    _
  %v17 = vld [vmem:[%s2] sm:$0xff]
  %v18 = vld [vmem:[%s2 + $0x8] sm:$0xff]
  %v19 = vld [vmem:[%s2 + $0x10] sm:$0xff]
  %v20 = vld [vmem:[%s2 + $0x18] sm:$0x3]
  %v21 = vld [vmem:[%s3] sm:$0xff]
  %v22 = vld [vmem:[%s3 + $0x8] sm:$0xff]
  %v23 = vld [vmem:[%s3 + $0x10] sm:$0xff]
  %v24 = vld [vmem:[%s3 + $0x18] sm:$0x3]
  %v25 = vld [vmem:[%s0] sm:$0xff]
  %v26 = vld [vmem:[%s0 + $0x8] sm:$0xff]
  %v27 = vld [vmem:[%s1] sm:$0xff]
  %v28 = vld [vmem:[%s1 + $0x8] sm:$0xff]
  %v29 = vld [vmem:[%s1 + $0x10] sm:$0xff]
  %v30 = vld [vmem:[%s1 + $0x18] sm:$0xff]
  %v31 = vld [vmem:[%s1 + $0x20] sm:$0xff]
  %v32 = vld [vmem:[%s1 + $0x28] sm:$0xff]
  %v33 = vld [vmem:[%s1 + $0x30] sm:$0xff]
  %v34 = vld [vmem:[%s1 + $0x38] sm:$0xff]
  %v35 = vld [vmem:[%s1 + $0x40] sm:$0xff]
  %v36 = vld [vmem:[%s1 + $0x48] sm:$0xff]
  %v37 = vld [vmem:[%s1 + $0x50] sm:$0xff]
  %v38 = vld [vmem:[%s1 + $0x58] sm:$0xff]
  %v39 = vld [vmem:[%s1 + $0x60] sm:$0xff]
  %v40 = vld [vmem:[%s1 + $0x68] sm:$0xff]
  %v41 = vld [vmem:[%s1 + $0x70] sm:$0xff]
  %v42 = vld [vmem:[%s1 + $0x78] sm:$0xff]
  %v43 = vmul.f32 %v17, %v17
  %v44 = vmul.f32 %v18, %v18
  %v45 = vmul.f32 %v19, %v19
  %v46 = vmul.f32 %v20, %v20
  %v47 = vmul.f32 %v21, %v21
  %v48 = vmul.f32 %v22, %v22
  %v49 = vmul.f32 %v23, %v23
  %v50 = vmul.f32 %v24, %v24
  %v51 = vmul.f32 %v17, %v21
  %v52 = vmul.f32 %v18, %v22
  %v53 = vmul.f32 %v19, %v23
  %v54 = vmul.f32 %v20, %v24
  %vm55 = vcmask 211968
  %v57 = vsel %vm55, %v25, 0
  %v60 = vsel %vm55, %v26, 0
  %vm62 = vcmask 1041408
  %v64 = vsel %vm62, %v20, 0
  %v67 = vsel %vm62, %v24, 0
  %v70 = vsel %vm62, %v46, 0
  %v73 = vsel %vm62, %v50, 0
  %v76 = vsel %vm62, %v54, 0
  %78 = vmatprep.subr.mxu0 %v21
  %79 = vmatpush1.msra.mxu0 %v17
  %80 = vmatprep.subr.mxu0 %v22
  %81 = vmatpush1.msra.mxu0 %v18
  %82 = vmatprep.subr.mxu0 %v23
  %83 = vmatpush1.msra.mxu0 %v19
  %84 = vmatprep.subr.mxu0 %v67
  %85 = vmatpush1.msra.mxu0 %v64
  %86 = vmatprep.subr.mxu0 0.0
  %87 = vmatpush1.msra.mxu0 0.0
  %88 = vmatprep.subr.mxu0 0.0
  %89 = vmatpush1.msra.mxu0 0.0
  %90 = vmatprep.subr.mxu0 0.0
  %91 = vmatpush1.msra.mxu0 0.0
  %92 = vmatprep.subr.mxu0 0.0
  %93 = vmatpush1.msra.mxu0 0.0
  %94 = vmatprep.subr.mxu0 0.0
  %95 = vmatpush1.msra.mxu0 0.0
  %96 = vmatprep.subr.mxu0 0.0
  %97 = vmatpush1.msra.mxu0 0.0
  %98 = vmatprep.subr.mxu0 0.0
  %99 = vmatpush1.msra.mxu0 0.0
  %100 = vmatprep.subr.mxu0 0.0
  %101 = vmatpush1.msra.mxu0 0.0
  %102 = vmatprep.subr.mxu0 0.0
  %103 = vmatpush1.msra.mxu0 0.0
  %104 = vmatprep.subr.mxu0 0.0
  %105 = vmatpush1.msra.mxu0 0.0
  %106 = vmatprep.subr.mxu0 0.0
  %107 = vmatpush1.msra.mxu0 0.0
  %108 = vmatprep.subr.mxu0 0.0
  %109 = vmatpush1.msra.mxu0 0.0
  %110 = vmatprep.subr.mxu0 0.0
  %111 = vmatpush1.msra.mxu0 0.0
  %112 = vmatprep.subr.mxu0 0.0
  %113 = vmatpush1.msra.mxu0 0.0
  %114 = vmatprep.subr.mxu0 0.0
  %115 = vmatpush1.msra.mxu0 0.0
  %116 = vmatprep.subr.mxu0 0.0
  %117 = vmatpush1.msra.mxu0 0.0
  %118 = vmatprep.subr.mxu0 0.0
  %119 = vmatpush1.msra.mxu0 0.0
  %120 = vmatprep.subr.mxu0 0.0
  %121 = vmatpush1.msra.mxu0 0.0
  %122 = vmatprep.subr.mxu0 0.0
  %123 = vmatpush1.msra.mxu0 0.0
  %124 = vmatprep.subr.mxu0 0.0
  %125 = vmatpush1.msra.mxu0 0.0
  %126 = vmatprep.subr.mxu0 0.0
  %127 = vmatpush1.msra.mxu0 0.0
  %128 = vmatprep.subr.mxu0 0.0
  %129 = vmatpush1.msra.mxu0 0.0
  %130 = vmatprep.subr.mxu0 0.0
  %131 = vmatpush1.msra.mxu0 0.0
  %132 = vmatprep.subr.mxu0 0.0
  %133 = vmatpush1.msra.mxu0 0.0
  %134 = vmatprep.subr.mxu0 0.0
  %135 = vmatpush1.msra.mxu0 0.0
  %136 = vmatprep.subr.mxu0 0.0
  %137 = vmatpush1.msra.mxu0 0.0
  %138 = vmatprep.subr.mxu0 0.0
  %139 = vmatpush1.msra.mxu0 0.0
  %140 = vmatprep.subr.mxu0 0.0
  %141 = vmatpush1.msra.mxu0 0.0
  %142 = vmatprep.mubr.f32.mxu0 0.0
  %143 = vmatmul.mubr.f32.gmra.mrb[0].mxu0 %v57
  %v144 = vpop.f32.mrb[0].mxu0
  %v145 = vadd.f32 0.0, %v144
  %v146 = vpop.f32.mrb[0].mxu0
  %v147 = vadd.f32 0.0, %v146
  %148 = vmatprep.mubr.f32.mxu0 0.0
  %149 = vmatmul.mubr.f32.gmra.mrb[0].mxu0 %v60
  %v150 = vpop.f32.mrb[0].mxu0
  %v151 = vadd.f32 0.0, %v150
  %v152 = vpop.f32.mrb[0].mxu0
  %v153 = vadd.f32 0.0, %v152
  %154 = vdwg.mxu0
  %155 = vmatprep.subr.mxu0 %v47
  %156 = vmatpush1.msra.mxu0 %v43
  %157 = vmatprep.subr.mxu0 %v48
  %158 = vmatpush1.msra.mxu0 %v44
  %159 = vmatprep.subr.mxu0 %v49
  %160 = vmatpush1.msra.mxu0 %v45
  %161 = vmatprep.subr.mxu0 %v73
  %162 = vmatpush1.msra.mxu0 %v70
  %163 = vmatprep.subr.mxu0 0.0
  %164 = vmatpush1.msra.mxu0 0.0
  %165 = vmatprep.subr.mxu0 0.0
  %166 = vmatpush1.msra.mxu0 0.0
  %167 = vmatprep.subr.mxu0 0.0
  %168 = vmatpush1.msra.mxu0 0.0
  %169 = vmatprep.subr.mxu0 0.0
  %170 = vmatpush1.msra.mxu0 0.0
  %171 = vmatprep.subr.mxu0 0.0
  %172 = vmatpush1.msra.mxu0 0.0
  %173 = vmatprep.subr.mxu0 0.0
  %174 = vmatpush1.msra.mxu0 0.0
  %175 = vmatprep.subr.mxu0 0.0
  %176 = vmatpush1.msra.mxu0 0.0
  %177 = vmatprep.subr.mxu0 0.0
  %178 = vmatpush1.msra.mxu0 0.0
  %179 = vmatprep.subr.mxu0 0.0
  %180 = vmatpush1.msra.mxu0 0.0
  %181 = vmatprep.subr.mxu0 0.0
  %182 = vmatpush1.msra.mxu0 0.0
  %183 = vmatprep.subr.mxu0 0.0
  %184 = vmatpush1.msra.mxu0 0.0
  %185 = vmatprep.subr.mxu0 0.0
  %186 = vmatpush1.msra.mxu0 0.0
  %187 = vmatprep.subr.mxu0 0.0
  %188 = vmatpush1.msra.mxu0 0.0
  %189 = vmatprep.subr.mxu0 0.0
  %190 = vmatpush1.msra.mxu0 0.0
  %191 = vmatprep.subr.mxu0 0.0
  %192 = vmatpush1.msra.mxu0 0.0
  %193 = vmatprep.subr.mxu0 0.0
  %194 = vmatpush1.msra.mxu0 0.0
  %195 = vmatprep.subr.mxu0 0.0
  %196 = vmatpush1.msra.mxu0 0.0
  %197 = vmatprep.subr.mxu0 0.0
  %198 = vmatpush1.msra.mxu0 0.0
  %199 = vmatprep.subr.mxu0 0.0
  %200 = vmatpush1.msra.mxu0 0.0
  %201 = vmatprep.subr.mxu0 0.0
  %202 = vmatpush1.msra.mxu0 0.0
  %203 = vmatprep.subr.mxu0 0.0
  %204 = vmatpush1.msra.mxu0 0.0
  %205 = vmatprep.subr.mxu0 0.0
  %206 = vmatpush1.msra.mxu0 0.0
  %207 = vmatprep.subr.mxu0 0.0
  %208 = vmatpush1.msra.mxu0 0.0
  %209 = vmatprep.subr.mxu0 0.0
  %210 = vmatpush1.msra.mxu0 0.0
  %211 = vmatprep.subr.mxu0 0.0
  %212 = vmatpush1.msra.mxu0 0.0
  %213 = vmatprep.subr.mxu0 0.0
  %214 = vmatpush1.msra.mxu0 0.0
  %215 = vmatprep.subr.mxu0 0.0
  %216 = vmatpush1.msra.mxu0 0.0
  %217 = vmatprep.subr.mxu0 0.0
  %218 = vmatpush1.msra.mxu0 0.0
  %219 = vmatprep.mubr.f32.mxu0 0.0
  %220 = vmatmul.mubr.f32.gmra.mrb[0].mxu0 %v57
  %v221 = vpop.f32.mrb[0].mxu0
  %v222 = vadd.f32 0.0, %v221
  %v223 = vpop.f32.mrb[0].mxu0
  %v224 = vadd.f32 0.0, %v223
  %225 = vmatprep.mubr.f32.mxu0 0.0
  %226 = vmatmul.mubr.f32.gmra.mrb[0].mxu0 %v60
  %v227 = vpop.f32.mrb[0].mxu0
  %v228 = vadd.f32 0.0, %v227
  %v229 = vpop.f32.mrb[0].mxu0
  %v230 = vadd.f32 0.0, %v229
  %231 = vdwg.mxu0
  %232 = vmatprep.subr.mxu0 0.0
  %233 = vmatpush1.msra.mxu0 %v51
  %234 = vmatprep.subr.mxu0 0.0
  %235 = vmatpush1.msra.mxu0 %v52
  %236 = vmatprep.subr.mxu0 0.0
  %237 = vmatpush1.msra.mxu0 %v53
  %238 = vmatprep.subr.mxu0 0.0
  %239 = vmatpush1.msra.mxu0 %v76
  %240 = vmatprep.subr.mxu0 0.0
  %241 = vmatpush1.msra.mxu0 0.0
  %242 = vmatprep.subr.mxu0 0.0
  %243 = vmatpush1.msra.mxu0 0.0
  %244 = vmatprep.subr.mxu0 0.0
  %245 = vmatpush1.msra.mxu0 0.0
  %246 = vmatprep.subr.mxu0 0.0
  %247 = vmatpush1.msra.mxu0 0.0
  %248 = vmatprep.subr.mxu0 0.0
  %249 = vmatpush1.msra.mxu0 0.0
  %250 = vmatprep.subr.mxu0 0.0
  %251 = vmatpush1.msra.mxu0 0.0
  %252 = vmatprep.subr.mxu0 0.0
  %253 = vmatpush1.msra.mxu0 0.0
  %254 = vmatprep.subr.mxu0 0.0
  %255 = vmatpush1.msra.mxu0 0.0
  %256 = vmatprep.subr.mxu0 0.0
  %257 = vmatpush1.msra.mxu0 0.0
  %258 = vmatprep.subr.mxu0 0.0
  %259 = vmatpush1.msra.mxu0 0.0
  %260 = vmatprep.subr.mxu0 0.0
  %261 = vmatpush1.msra.mxu0 0.0
  %262 = vmatprep.subr.mxu0 0.0
  %263 = vmatpush1.msra.mxu0 0.0
  %264 = vmatprep.subr.mxu0 0.0
  %265 = vmatpush1.msra.mxu0 0.0
  %266 = vmatprep.subr.mxu0 0.0
  %267 = vmatpush1.msra.mxu0 0.0
  %268 = vmatprep.subr.mxu0 0.0
  %269 = vmatpush1.msra.mxu0 0.0
  %270 = vmatprep.subr.mxu0 0.0
  %271 = vmatpush1.msra.mxu0 0.0
  %272 = vmatprep.subr.mxu0 0.0
  %273 = vmatpush1.msra.mxu0 0.0
  %274 = vmatprep.subr.mxu0 0.0
  %275 = vmatpush1.msra.mxu0 0.0
  %276 = vmatprep.subr.mxu0 0.0
  %277 = vmatpush1.msra.mxu0 0.0
  %278 = vmatprep.subr.mxu0 0.0
  %279 = vmatpush1.msra.mxu0 0.0
  %280 = vmatprep.subr.mxu0 0.0
  %281 = vmatpush1.msra.mxu0 0.0
  %282 = vmatprep.subr.mxu0 0.0
  %283 = vmatpush1.msra.mxu0 0.0
  %284 = vmatprep.subr.mxu0 0.0
  %285 = vmatpush1.msra.mxu0 0.0
  %286 = vmatprep.subr.mxu0 0.0
  %287 = vmatpush1.msra.mxu0 0.0
  %288 = vmatprep.subr.mxu0 0.0
  %289 = vmatpush1.msra.mxu0 0.0
  %290 = vmatprep.subr.mxu0 0.0
  %291 = vmatpush1.msra.mxu0 0.0
  %292 = vmatprep.subr.mxu0 0.0
  %293 = vmatpush1.msra.mxu0 0.0
  %294 = vmatprep.subr.mxu0 0.0
  %295 = vmatpush1.msra.mxu0 0.0
  %296 = vmatprep.mubr.f32.mxu0 0.0
  %297 = vmatmul.mubr.f32.gmra.mrb[0].mxu0 %v57
  %v298 = vpop.f32.mrb[0].mxu0
  %v299 = vadd.f32 0.0, %v298
  %v300 = vpop.f32.mrb[0].mxu0
  %301 = vmatprep.mubr.f32.mxu0 0.0
  %302 = vmatmul.mubr.f32.gmra.mrb[0].mxu0 %v60
  %v303 = vpop.f32.mrb[0].mxu0
  %v304 = vadd.f32 0.0, %v303
  %v305 = vpop.f32.mrb[0].mxu0
  %306 = vdwg.mxu0
  %307 = vmatprep.subr.mxu0 0.0
  %308 = vmatpush1.msra.mxu0 %v27
  %309 = vmatprep.subr.mxu0 0.0
  %310 = vmatpush1.msra.mxu0 %v28
  %311 = vmatprep.subr.mxu0 0.0
  %312 = vmatpush1.msra.mxu0 %v29
  %313 = vmatprep.subr.mxu0 0.0
  %314 = vmatpush1.msra.mxu0 %v30
  %315 = vmatprep.subr.mxu0 0.0
  %316 = vmatpush1.msra.mxu0 %v31
  %317 = vmatprep.subr.mxu0 0.0
  %318 = vmatpush1.msra.mxu0 %v32
  %319 = vmatprep.subr.mxu0 0.0
  %320 = vmatpush1.msra.mxu0 %v33
  %321 = vmatprep.subr.mxu0 0.0
  %322 = vmatpush1.msra.mxu0 %v34
  %323 = vmatprep.subr.mxu0 0.0
  %324 = vmatpush1.msra.mxu0 %v35
  %325 = vmatprep.subr.mxu0 0.0
  %326 = vmatpush1.msra.mxu0 %v36
  %327 = vmatprep.subr.mxu0 0.0
  %328 = vmatpush1.msra.mxu0 %v37
  %329 = vmatprep.subr.mxu0 0.0
  %330 = vmatpush1.msra.mxu0 %v38
  %331 = vmatprep.subr.mxu0 0.0
  %332 = vmatpush1.msra.mxu0 %v39
  %333 = vmatprep.subr.mxu0 0.0
  %334 = vmatpush1.msra.mxu0 %v40
  %335 = vmatprep.subr.mxu0 0.0
  %336 = vmatpush1.msra.mxu0 %v41
  %337 = vmatprep.subr.mxu0 0.0
  %338 = vmatpush1.msra.mxu0 %v42
  %339 = vmatprep.subr.mxu0 0.0
  %340 = vmatpush1.msra.mxu0 0.0
  %341 = vmatprep.subr.mxu0 0.0
  %342 = vmatpush1.msra.mxu0 0.0
  %343 = vmatprep.subr.mxu0 0.0
  %344 = vmatpush1.msra.mxu0 0.0
  %345 = vmatprep.subr.mxu0 0.0
  %346 = vmatpush1.msra.mxu0 0.0
  %347 = vmatprep.subr.mxu0 0.0
  %348 = vmatpush1.msra.mxu0 0.0
  %349 = vmatprep.subr.mxu0 0.0
  %350 = vmatpush1.msra.mxu0 0.0
  %351 = vmatprep.subr.mxu0 0.0
  %352 = vmatpush1.msra.mxu0 0.0
  %353 = vmatprep.subr.mxu0 0.0
  %354 = vmatpush1.msra.mxu0 0.0
  %355 = vmatprep.subr.mxu0 0.0
  %356 = vmatpush1.msra.mxu0 0.0
  %357 = vmatprep.subr.mxu0 0.0
  %358 = vmatpush1.msra.mxu0 0.0
  %359 = vmatprep.subr.mxu0 0.0
  %360 = vmatpush1.msra.mxu0 0.0
  %361 = vmatprep.subr.mxu0 0.0
  %362 = vmatpush1.msra.mxu0 0.0
  %363 = vmatprep.subr.mxu0 0.0
  %364 = vmatpush1.msra.mxu0 0.0
  %365 = vmatprep.subr.mxu0 0.0
  %366 = vmatpush1.msra.mxu0 0.0
  %367 = vmatprep.subr.mxu0 0.0
  %368 = vmatpush1.msra.mxu0 0.0
  %369 = vmatprep.subr.mxu0 0.0
  %370 = vmatpush1.msra.mxu0 0.0
  %371 = vmatprep.mubr.f32.mxu0 0.0
  %372 = vmatmul.mubr.f32.gmra.mrb[0].mxu0 %v145
  %v373 = vpop.f32.mrb[0].mxu0
  %v374 = vadd.f32 0.0, %v373
  %v375 = vpop.f32.mrb[0].mxu0
  %376 = vmatprep.mubr.f32.mxu0 0.0
  %377 = vmatmul.mubr.f32.gmra.mrb[0].mxu0 %v151
  %v378 = vpop.f32.mrb[0].mxu0
  %v379 = vadd.f32 0.0, %v378
  %v380 = vpop.f32.mrb[0].mxu0
  %381 = vdwg.mxu0
  %382 = vmatprep.subr.mxu0 0.0
  %383 = vmatpush1.msra.mxu0 %v27
  %384 = vmatprep.subr.mxu0 0.0
  %385 = vmatpush1.msra.mxu0 %v28
  %386 = vmatprep.subr.mxu0 0.0
  %387 = vmatpush1.msra.mxu0 %v29
  %388 = vmatprep.subr.mxu0 0.0
  %389 = vmatpush1.msra.mxu0 %v30
  %390 = vmatprep.subr.mxu0 0.0
  %391 = vmatpush1.msra.mxu0 %v31
  %392 = vmatprep.subr.mxu0 0.0
  %393 = vmatpush1.msra.mxu0 %v32
  %394 = vmatprep.subr.mxu0 0.0
  %395 = vmatpush1.msra.mxu0 %v33
  %396 = vmatprep.subr.mxu0 0.0
  %397 = vmatpush1.msra.mxu0 %v34
  %398 = vmatprep.subr.mxu0 0.0
  %399 = vmatpush1.msra.mxu0 %v35
  %400 = vmatprep.subr.mxu0 0.0
  %401 = vmatpush1.msra.mxu0 %v36
  %402 = vmatprep.subr.mxu0 0.0
  %403 = vmatpush1.msra.mxu0 %v37
  %404 = vmatprep.subr.mxu0 0.0
  %405 = vmatpush1.msra.mxu0 %v38
  %406 = vmatprep.subr.mxu0 0.0
  %407 = vmatpush1.msra.mxu0 %v39
  %408 = vmatprep.subr.mxu0 0.0
  %409 = vmatpush1.msra.mxu0 %v40
  %410 = vmatprep.subr.mxu0 0.0
  %411 = vmatpush1.msra.mxu0 %v41
  %412 = vmatprep.subr.mxu0 0.0
  %413 = vmatpush1.msra.mxu0 %v42
  %414 = vmatprep.subr.mxu0 0.0
  %415 = vmatpush1.msra.mxu0 0.0
  %416 = vmatprep.subr.mxu0 0.0
  %417 = vmatpush1.msra.mxu0 0.0
  %418 = vmatprep.subr.mxu0 0.0
  %419 = vmatpush1.msra.mxu0 0.0
  %420 = vmatprep.subr.mxu0 0.0
  %421 = vmatpush1.msra.mxu0 0.0
  %422 = vmatprep.subr.mxu0 0.0
  %423 = vmatpush1.msra.mxu0 0.0
  %424 = vmatprep.subr.mxu0 0.0
  %425 = vmatpush1.msra.mxu0 0.0
  %426 = vmatprep.subr.mxu0 0.0
  %427 = vmatpush1.msra.mxu0 0.0
  %428 = vmatprep.subr.mxu0 0.0
  %429 = vmatpush1.msra.mxu0 0.0
  %430 = vmatprep.subr.mxu0 0.0
  %431 = vmatpush1.msra.mxu0 0.0
  %432 = vmatprep.subr.mxu0 0.0
  %433 = vmatpush1.msra.mxu0 0.0
  %434 = vmatprep.subr.mxu0 0.0
  %435 = vmatpush1.msra.mxu0 0.0
  %436 = vmatprep.subr.mxu0 0.0
  %437 = vmatpush1.msra.mxu0 0.0
  %438 = vmatprep.subr.mxu0 0.0
  %439 = vmatpush1.msra.mxu0 0.0
  %440 = vmatprep.subr.mxu0 0.0
  %441 = vmatpush1.msra.mxu0 0.0
  %442 = vmatprep.subr.mxu0 0.0
  %443 = vmatpush1.msra.mxu0 0.0
  %444 = vmatprep.subr.mxu0 0.0
  %445 = vmatpush1.msra.mxu0 0.0
  %446 = vmatprep.mubr.f32.mxu0 0.0
  %447 = vmatmul.mubr.f32.gmra.mrb[0].mxu0 %v147
  %v448 = vpop.f32.mrb[0].mxu0
  %v449 = vadd.f32 0.0, %v448
  %v450 = vpop.f32.mrb[0].mxu0
  %451 = vmatprep.mubr.f32.mxu0 0.0
  %452 = vmatmul.mubr.f32.gmra.mrb[0].mxu0 %v153
  %v453 = vpop.f32.mrb[0].mxu0
  %v454 = vadd.f32 0.0, %v453
  %v455 = vpop.f32.mrb[0].mxu0
  %456 = vdwg.mxu0
  %457 = vmatprep.subr.mxu0 0.0
  %458 = vmatpush1.msra.mxu0 %v27
  %459 = vmatprep.subr.mxu0 0.0
  %460 = vmatpush1.msra.mxu0 %v28
  %461 = vmatprep.subr.mxu0 0.0
  %462 = vmatpush1.msra.mxu0 %v29
  %463 = vmatprep.subr.mxu0 0.0
  %464 = vmatpush1.msra.mxu0 %v30
  %465 = vmatprep.subr.mxu0 0.0
  %466 = vmatpush1.msra.mxu0 %v31
  %467 = vmatprep.subr.mxu0 0.0
  %468 = vmatpush1.msra.mxu0 %v32
  %469 = vmatprep.subr.mxu0 0.0
  %470 = vmatpush1.msra.mxu0 %v33
  %471 = vmatprep.subr.mxu0 0.0
  %472 = vmatpush1.msra.mxu0 %v34
  %473 = vmatprep.subr.mxu0 0.0
  %474 = vmatpush1.msra.mxu0 %v35
  %475 = vmatprep.subr.mxu0 0.0
  %476 = vmatpush1.msra.mxu0 %v36
  %477 = vmatprep.subr.mxu0 0.0
  %478 = vmatpush1.msra.mxu0 %v37
  %479 = vmatprep.subr.mxu0 0.0
  %480 = vmatpush1.msra.mxu0 %v38
  %481 = vmatprep.subr.mxu0 0.0
  %482 = vmatpush1.msra.mxu0 %v39
  %483 = vmatprep.subr.mxu0 0.0
  %484 = vmatpush1.msra.mxu0 %v40
  %485 = vmatprep.subr.mxu0 0.0
  %486 = vmatpush1.msra.mxu0 %v41
  %487 = vmatprep.subr.mxu0 0.0
  %488 = vmatpush1.msra.mxu0 %v42
  %489 = vmatprep.subr.mxu0 0.0
  %490 = vmatpush1.msra.mxu0 0.0
  %491 = vmatprep.subr.mxu0 0.0
  %492 = vmatpush1.msra.mxu0 0.0
  %493 = vmatprep.subr.mxu0 0.0
  %494 = vmatpush1.msra.mxu0 0.0
  %495 = vmatprep.subr.mxu0 0.0
  %496 = vmatpush1.msra.mxu0 0.0
  %497 = vmatprep.subr.mxu0 0.0
  %498 = vmatpush1.msra.mxu0 0.0
  %499 = vmatprep.subr.mxu0 0.0
  %500 = vmatpush1.msra.mxu0 0.0
  %501 = vmatprep.subr.mxu0 0.0
  %502 = vmatpush1.msra.mxu0 0.0
  %503 = vmatprep.subr.mxu0 0.0
  %504 = vmatpush1.msra.mxu0 0.0
  %505 = vmatprep.subr.mxu0 0.0
  %506 = vmatpush1.msra.mxu0 0.0
  %507 = vmatprep.subr.mxu0 0.0
  %508 = vmatpush1.msra.mxu0 0.0
  %509 = vmatprep.subr.mxu0 0.0
  %510 = vmatpush1.msra.mxu0 0.0
  %511 = vmatprep.subr.mxu0 0.0
  %512 = vmatpush1.msra.mxu0 0.0
  %513 = vmatprep.subr.mxu0 0.0
  %514 = vmatpush1.msra.mxu0 0.0
  %515 = vmatprep.subr.mxu0 0.0
  %516 = vmatpush1.msra.mxu0 0.0
  %517 = vmatprep.subr.mxu0 0.0
  %518 = vmatpush1.msra.mxu0 0.0
  %519 = vmatprep.subr.mxu0 0.0
  %520 = vmatpush1.msra.mxu0 0.0
  %521 = vmatprep.mubr.f32.mxu0 0.0
  %522 = vmatmul.mubr.f32.gmra.mrb[0].mxu0 %v222
  %v523 = vpop.f32.mrb[0].mxu0
  %v524 = vadd.f32 0.0, %v523
  %v525 = vpop.f32.mrb[0].mxu0
  %526 = vmatprep.mubr.f32.mxu0 0.0
  %527 = vmatmul.mubr.f32.gmra.mrb[0].mxu0 %v228
  %v528 = vpop.f32.mrb[0].mxu0
  %v529 = vadd.f32 0.0, %v528
  %v530 = vpop.f32.mrb[0].mxu0
  %531 = vdwg.mxu0
  %532 = vmatprep.subr.mxu0 0.0
  %533 = vmatpush1.msra.mxu0 %v27
  %534 = vmatprep.subr.mxu0 0.0
  %535 = vmatpush1.msra.mxu0 %v28
  %536 = vmatprep.subr.mxu0 0.0
  %537 = vmatpush1.msra.mxu0 %v29
  %538 = vmatprep.subr.mxu0 0.0
  %539 = vmatpush1.msra.mxu0 %v30
  %540 = vmatprep.subr.mxu0 0.0
  %541 = vmatpush1.msra.mxu0 %v31
  %542 = vmatprep.subr.mxu0 0.0
  %543 = vmatpush1.msra.mxu0 %v32
  %544 = vmatprep.subr.mxu0 0.0
  %545 = vmatpush1.msra.mxu0 %v33
  %546 = vmatprep.subr.mxu0 0.0
  %547 = vmatpush1.msra.mxu0 %v34
  %548 = vmatprep.subr.mxu0 0.0
  %549 = vmatpush1.msra.mxu0 %v35
  %550 = vmatprep.subr.mxu0 0.0
  %551 = vmatpush1.msra.mxu0 %v36
  %552 = vmatprep.subr.mxu0 0.0
  %553 = vmatpush1.msra.mxu0 %v37
  %554 = vmatprep.subr.mxu0 0.0
  %555 = vmatpush1.msra.mxu0 %v38
  %556 = vmatprep.subr.mxu0 0.0
  %557 = vmatpush1.msra.mxu0 %v39
  %558 = vmatprep.subr.mxu0 0.0
  %559 = vmatpush1.msra.mxu0 %v40
  %560 = vmatprep.subr.mxu0 0.0
  %561 = vmatpush1.msra.mxu0 %v41
  %562 = vmatprep.subr.mxu0 0.0
  %563 = vmatpush1.msra.mxu0 %v42
  %564 = vmatprep.subr.mxu0 0.0
  %565 = vmatpush1.msra.mxu0 0.0
  %566 = vmatprep.subr.mxu0 0.0
  %567 = vmatpush1.msra.mxu0 0.0
  %568 = vmatprep.subr.mxu0 0.0
  %569 = vmatpush1.msra.mxu0 0.0
  %570 = vmatprep.subr.mxu0 0.0
  %571 = vmatpush1.msra.mxu0 0.0
  %572 = vmatprep.subr.mxu0 0.0
  %573 = vmatpush1.msra.mxu0 0.0
  %574 = vmatprep.subr.mxu0 0.0
  %575 = vmatpush1.msra.mxu0 0.0
  %576 = vmatprep.subr.mxu0 0.0
  %577 = vmatpush1.msra.mxu0 0.0
  %578 = vmatprep.subr.mxu0 0.0
  %579 = vmatpush1.msra.mxu0 0.0
  %580 = vmatprep.subr.mxu0 0.0
  %581 = vmatpush1.msra.mxu0 0.0
  %582 = vmatprep.subr.mxu0 0.0
  %583 = vmatpush1.msra.mxu0 0.0
  %584 = vmatprep.subr.mxu0 0.0
  %585 = vmatpush1.msra.mxu0 0.0
  %586 = vmatprep.subr.mxu0 0.0
  %587 = vmatpush1.msra.mxu0 0.0
  %588 = vmatprep.subr.mxu0 0.0
  %589 = vmatpush1.msra.mxu0 0.0
  %590 = vmatprep.subr.mxu0 0.0
  %591 = vmatpush1.msra.mxu0 0.0
  %592 = vmatprep.subr.mxu0 0.0
  %593 = vmatpush1.msra.mxu0 0.0
  %594 = vmatprep.subr.mxu0 0.0
  %595 = vmatpush1.msra.mxu0 0.0
  %596 = vmatprep.mubr.f32.mxu0 0.0
  %597 = vmatmul.mubr.f32.gmra.mrb[0].mxu0 %v224
  %v598 = vpop.f32.mrb[0].mxu0
  %v599 = vadd.f32 0.0, %v598
  %v600 = vpop.f32.mrb[0].mxu0
  %601 = vmatprep.mubr.f32.mxu0 0.0
  %602 = vmatmul.mubr.f32.gmra.mrb[0].mxu0 %v230
  %v603 = vpop.f32.mrb[0].mxu0
  %v604 = vadd.f32 0.0, %v603
  %v605 = vpop.f32.mrb[0].mxu0
  %606 = vdwg.mxu0
  %607 = vmatprep.subr.mxu0 0.0
  %608 = vmatpush1.msra.mxu0 %v27
  %609 = vmatprep.subr.mxu0 0.0
  %610 = vmatpush1.msra.mxu0 %v28
  %611 = vmatprep.subr.mxu0 0.0
  %612 = vmatpush1.msra.mxu0 %v29
  %613 = vmatprep.subr.mxu0 0.0
  %614 = vmatpush1.msra.mxu0 %v30
  %615 = vmatprep.subr.mxu0 0.0
  %616 = vmatpush1.msra.mxu0 %v31
  %617 = vmatprep.subr.mxu0 0.0
  %618 = vmatpush1.msra.mxu0 %v32
  %619 = vmatprep.subr.mxu0 0.0
  %620 = vmatpush1.msra.mxu0 %v33
  %621 = vmatprep.subr.mxu0 0.0
  %622 = vmatpush1.msra.mxu0 %v34
  %623 = vmatprep.subr.mxu0 0.0
  %624 = vmatpush1.msra.mxu0 %v35
  %625 = vmatprep.subr.mxu0 0.0
  %626 = vmatpush1.msra.mxu0 %v36
  %627 = vmatprep.subr.mxu0 0.0
  %628 = vmatpush1.msra.mxu0 %v37
  %629 = vmatprep.subr.mxu0 0.0
  %630 = vmatpush1.msra.mxu0 %v38
  %631 = vmatprep.subr.mxu0 0.0
  %632 = vmatpush1.msra.mxu0 %v39
  %633 = vmatprep.subr.mxu0 0.0
  %634 = vmatpush1.msra.mxu0 %v40
  %635 = vmatprep.subr.mxu0 0.0
  %636 = vmatpush1.msra.mxu0 %v41
  %637 = vmatprep.subr.mxu0 0.0
  %638 = vmatpush1.msra.mxu0 %v42
  %639 = vmatprep.subr.mxu0 0.0
  %640 = vmatpush1.msra.mxu0 0.0
  %641 = vmatprep.subr.mxu0 0.0
  %642 = vmatpush1.msra.mxu0 0.0
  %643 = vmatprep.subr.mxu0 0.0
  %644 = vmatpush1.msra.mxu0 0.0
  %645 = vmatprep.subr.mxu0 0.0
  %646 = vmatpush1.msra.mxu0 0.0
  %647 = vmatprep.subr.mxu0 0.0
  %648 = vmatpush1.msra.mxu0 0.0
  %649 = vmatprep.subr.mxu0 0.0
  %650 = vmatpush1.msra.mxu0 0.0
  %651 = vmatprep.subr.mxu0 0.0
  %652 = vmatpush1.msra.mxu0 0.0
  %653 = vmatprep.subr.mxu0 0.0
  %654 = vmatpush1.msra.mxu0 0.0
  %655 = vmatprep.subr.mxu0 0.0
  %656 = vmatpush1.msra.mxu0 0.0
  %657 = vmatprep.subr.mxu0 0.0
  %658 = vmatpush1.msra.mxu0 0.0
  %659 = vmatprep.subr.mxu0 0.0
  %660 = vmatpush1.msra.mxu0 0.0
  %661 = vmatprep.subr.mxu0 0.0
  %662 = vmatpush1.msra.mxu0 0.0
  %663 = vmatprep.subr.mxu0 0.0
  %664 = vmatpush1.msra.mxu0 0.0
  %665 = vmatprep.subr.mxu0 0.0
  %666 = vmatpush1.msra.mxu0 0.0
  %667 = vmatprep.subr.mxu0 0.0
  %668 = vmatpush1.msra.mxu0 0.0
  %669 = vmatprep.subr.mxu0 0.0
  %670 = vmatpush1.msra.mxu0 0.0
  %671 = vmatprep.mubr.f32.mxu0 0.0
  %672 = vmatmul.mubr.f32.gmra.mrb[0].mxu0 %v299
  %v673 = vpop.f32.mrb[0].mxu0
  %v674 = vadd.f32 0.0, %v673
  %v675 = vpop.f32.mrb[0].mxu0
  %676 = vmatprep.mubr.f32.mxu0 0.0
  %677 = vmatmul.mubr.f32.gmra.mrb[0].mxu0 %v304
  %v678 = vpop.f32.mrb[0].mxu0
  %v679 = vadd.f32 0.0, %v678
  %v680 = vpop.f32.mrb[0].mxu0
  %681 = vdwg.mxu0
  %v682 = vmul.f32 %v374, %v374
  %v683 = vmul.f32 %v379, %v379
  %v684 = vmul.f32 %v449, %v449
  %v685 = vmul.f32 %v454, %v454
  %v686 = vmul.f32 %v374, %v449
  %v687 = vmul.f32 %v379, %v454
  %v688 = vsub.f32 %v524, %v682
  %v689 = vsub.f32 %v529, %v683
  %v690 = vsub.f32 %v599, %v684
  %v691 = vsub.f32 %v604, %v685
  %v692 = vsub.f32 %v674, %v686
  %v693 = vsub.f32 %v679, %v687
  %v694 = vmul.f32 %v686, 2.0
  %v695 = vmul.f32 %v687, 2.0
  %v696 = vadd.f32 %v694, 0.0001
  %v697 = vadd.f32 %v695, 0.0001
  %v698 = vmul.f32 %v692, 2.0
  %v699 = vmul.f32 %v693, 2.0
  %v700 = vadd.f32 %v698, 0.0009
  %v701 = vadd.f32 %v699, 0.0009
  %v702 = vmul.f32 %v696, %v700
  %v703 = vmul.f32 %v697, %v701
  %v704 = vadd.f32 %v682, %v684
  %v705 = vadd.f32 %v683, %v685
  %v706 = vadd.f32 %v704, 0.0001
  %v707 = vadd.f32 %v705, 0.0001
  %v708 = vadd.f32 %v688, %v690
  %v709 = vadd.f32 %v689, %v691
  %v710 = vadd.f32 %v708, 0.0009
  %v711 = vadd.f32 %v709, 0.0009
  %v712 = vmul.f32 %v706, %v710
  %v713 = vmul.f32 %v707, %v711
  %v714 = vrcp.pop %v712
  %v715 = vmul.f32 %v702, %v714
  %v716 = vrcp.pop %v713
  %v717 = vmul.f32 %v703, %v716
  %v718 = vadd.f32 %v715, %v717
  %v719 = vrot.slane %v718, 4
  %v720 = vadd.f32 %v718, %v719
  %v721 = vrot.slane %v720, 2
  %v722 = vadd.f32 %v720, %v721
  %v723 = vrot.slane %v722, 1
  %v724 = vadd.f32 %v722, %v723
  %725 = vst [vmem:[%s4] sm:$0x1] %v724
  // Predicated region
  $region18: #{ssim_pallas.1} parent=0 // pred_check
    _
  $region19: #{ssim_pallas.1} parent=0 // pred_check_branch
    %727 = sbr.rel (0) target = $region21
  $region20: #{ssim_pallas.1} parent=0 // pred_region
    _
  $region21: #{ssim_pallas.1} parent=0 // pred_fallthru
    _
  // Predicated region
  $region22: #{ssim_pallas.1} parent=0 // pred_check
    _
  $region23: #{ssim_pallas.1} parent=0 // pred_check_branch
    %729 = sbr.rel (0) target = $region25
  $region24: #{ssim_pallas.1} parent=0 // pred_region
    _
  $region25: #{ssim_pallas.1} parent=0 // pred_fallthru
    _

</llo_original>
